<compile_context>
chip_gen: v7x
topology: tpu7x:2x2x1
jax: 0.10.0
libtpu: 0.0.40
codegen_flags: <defaults>
</compile_context>

<pallas_src>
import jax
import jax.numpy as jnp
from jax.experimental import pallas as pl
from jax.experimental.pallas import tpu as pltpu

_LANES = 128
_SUBLANES_BY_ITEMSIZE = {4: 8, 2: 16, 1: 32}  # min sublane tile per elem width
_MIB = 1024 * 1024
# Logical bytes per block on the ragged (1, N) path.  (1, N) VMEM blocks can be
# sublane-padded up to 8x, so keep this small enough that 4 buffers (in+out,
# double-buffered) fit every generation's default scoped-VMEM budget.
_RAGGED_BLOCK_BYTES = 256 * 1024


def _inverted_relu_kernel(x_ref, o_ref):
    x = x_ref[...]
    # -relu(x) == -max(x, 0); keep this form so signed zeros track -F.relu(x)
    # (min(-x, 0) would flip -0.0 -> +0.0 for negative inputs).
    o_ref[...] = -jnp.maximum(x, jnp.zeros_like(x))


def _chip_config():
    """Return (target_block_bytes, vmem_limit_bytes, is_v7x) for the local TPU."""
    kind = ""
    try:
        kind = jax.devices()[0].device_kind.lower()
    except Exception:
        pass
    if "v7" in kind or "tpu7" in kind:
        block_bytes, vmem_limit, is_v7x = 4 * _MIB, 32 * _MIB, True
    elif "v6" in kind or "6e" in kind:
        block_bytes, vmem_limit, is_v7x = 8 * _MIB, 64 * _MIB, False
    else:
        # v5e / v5p / v4 / unknown: conservative, fits 16 MiB scoped VMEM.
        block_bytes, vmem_limit, is_v7x = 2 * _MIB, None, False
    try:
        # Safety cap: 2x(in) + 2x(out) buffers must fit physical VMEM easily.
        vmem_cap = pltpu.get_tpu_info().vmem_capacity_bytes
        block_bytes = max(_MIB, min(block_bytes, vmem_cap // 16))
    except Exception:
        pass
    return block_bytes, vmem_limit, is_v7x


def _compiler_params(is_v7x, vmem_limit):
    if is_v7x:
        sem = getattr(pltpu, "CORE_PARALLEL", "parallel")
    else:
        sem = "parallel"
    return pltpu.CompilerParams(
        dimension_semantics=(sem,),
        vmem_limit_bytes=vmem_limit,
    )


def _cost(total, itemsize):
    return pl.CostEstimate(
        flops=total, transcendentals=0, bytes_accessed=2 * total * itemsize
    )


def _pallas_rows(x_flat, total, dtype, itemsize, sublanes, block_bytes,
                 vmem_limit, is_v7x):
    """Aligned path: total % 128 == 0 -> free reshape to a (rows, 128) slab."""
    rows = total // _LANES
    x2d = jnp.reshape(x_flat, (rows, _LANES))

    block_rows = min(block_bytes // (_LANES * itemsize), rows)
    if is_v7x:
        # >= 4 steps (>= 2 pipelined per TensorCore) whenever the data allows.
        block_rows = min(block_rows, max(sublanes, pl.cdiv(rows, 4)))
    if rows <= sublanes:
        block_rows = rows
    else:
        block_rows = max(sublanes, (block_rows // sublanes) * sublanes)
    grid = (pl.cdiv(rows, block_rows),)  # ragged final row-block is masked

    out2d = pl.pallas_call(
        _inverted_relu_kernel,
        out_shape=jax.ShapeDtypeStruct((rows, _LANES), dtype),
        grid_spec=pltpu.PrefetchScalarGridSpec(
            num_scalar_prefetch=0,
            grid=grid,
            in_specs=[pl.BlockSpec((block_rows, _LANES), lambda i: (i, 0))],
            out_specs=pl.BlockSpec((block_rows, _LANES), lambda i: (i, 0)),
        ),
        compiler_params=_compiler_params(is_v7x, vmem_limit),
        cost_estimate=_cost(total, itemsize),
    )(x2d)
    return jnp.reshape(out2d, (total,))


def _pallas_lanes(x_flat, total, dtype, itemsize, sublanes, block_bytes,
                  vmem_limit, is_v7x):
    """Ragged path: total % 128 != 0 -> (1, total) slab blocked along lanes.

    No jnp.pad / un-pad slice: Pallas masks the ragged final lane-block, so
    this stays a pure 2-pass op just like the aligned path.
    """
    x2d = jnp.reshape(x_flat, (1, total))
    tile = sublanes * _LANES  # keep the lane-block a multiple of the min tile

    block_elems = max(tile, min(_RAGGED_BLOCK_BYTES, block_bytes) // itemsize)
    if is_v7x:
        block_elems = min(block_elems, max(tile, pl.cdiv(total, 4)))
    block_elems = max(tile, (block_elems // tile) * tile)
    grid = (pl.cdiv(total, block_elems),)  # ragged final block is masked

    out2d = pl.pallas_call(
        _inverted_relu_kernel,
        out_shape=jax.ShapeDtypeStruct((1, total), dtype),
        grid_spec=pltpu.PrefetchScalarGridSpec(
            num_scalar_prefetch=0,
            grid=grid,
            in_specs=[pl.BlockSpec((1, block_elems), lambda i: (0, i))],
            out_specs=pl.BlockSpec((1, block_elems), lambda i: (0, i)),
        ),
        compiler_params=_compiler_params(is_v7x, vmem_limit),
        cost_estimate=_cost(total, itemsize),
    )(x2d)
    return jnp.reshape(out2d, (total,))


def inverted_relu(x: jax.Array, *, force_pallas: bool = False) -> jax.Array:
    """y = -relu(x), elementwise; Pallas TPU kernel above the small-input cutoff."""
    orig_shape = x.shape
    dtype = x.dtype
    total = x.size
    if total == 0:
        return x

    itemsize = jnp.dtype(dtype).itemsize
    sublanes = _SUBLANES_BY_ITEMSIZE.get(itemsize, 8)
    block_bytes, vmem_limit, is_v7x = _chip_config()

    # Anything that fits in a single block is already at the HBM roofline as a
    # fused XLA elementwise; the Pallas kernel only wins once >= 2 blocks give
    # it a double-buffered DMA pipeline.
    min_tile = sublanes * _LANES
    use_xla = total < min_tile or (
        not force_pallas and total * itemsize <= block_bytes
    )
    if use_xla:
        return -jnp.maximum(x, jnp.zeros((), dtype=dtype))

    x_flat = jnp.reshape(x, (total,))  # contiguous -> free
    if total % _LANES == 0:
        out_flat = _pallas_rows(x_flat, total, dtype, itemsize, sublanes,
                                block_bytes, vmem_limit, is_v7x)
    else:
        out_flat = _pallas_lanes(x_flat, total, dtype, itemsize, sublanes,
                                 block_bytes, vmem_limit, is_v7x)
    return jnp.reshape(out_flat, orig_shape)


def _ref(x):
    return -jnp.maximum(x, jnp.zeros((), dtype=x.dtype))


if __name__ == "__main__":
    key = jax.random.PRNGKey(0)
    k0, k1, k2, k3, k4 = jax.random.split(key, 5)

    # 1) Canonical small NCHW input (batch=2, channels=4, spatial=16x16):
    #    dispatcher takes the XLA fast path.
    x_small = jax.random.normal(k0, (2, 4, 16, 16), dtype=jnp.float32)
    y_small = jax.block_until_ready(inverted_relu(x_small))
    assert y_small.shape == x_small.shape and y_small.dtype == x_small.dtype
    assert jnp.array_equal(y_small, _ref(x_small))

    # 2) Aligned (rows, 128) Pallas path, forced so it runs even at small size.
    x_med = jax.random.normal(k1, (8, 16, 32, 32), dtype=jnp.float32)
    y_med = jax.block_until_ready(inverted_relu(x_med, force_pallas=True))
    assert y_med.shape == x_med.shape and y_med.dtype == x_med.dtype
    assert jnp.array_equal(y_med, _ref(x_med))

    # 3) Ragged size (not a multiple of 128): (1, total) lane-blocked Pallas
    #    path with a masked ragged final block (no pad / un-pad copies).
    x_rag = jax.random.normal(k2, (2, 5, 97, 101), dtype=jnp.float32)
    y_rag = jax.block_until_ready(inverted_relu(x_rag, force_pallas=True))
    assert y_rag.shape == x_rag.shape and y_rag.dtype == x_rag.dtype
    assert jnp.array_equal(y_rag, _ref(x_rag))

    # 4) bf16 input: exercises the dtype-aware (16, 128) sublane granularity.
    x_bf16 = jax.random.normal(k3, (4, 8, 16, 32), dtype=jnp.bfloat16)
    y_bf16 = jax.block_until_ready(inverted_relu(x_bf16, force_pallas=True))
    assert y_bf16.shape == x_bf16.shape and y_bf16.dtype == x_bf16.dtype
    assert jnp.array_equal(y_bf16, _ref(x_bf16))

    # 5) Large enough (9 MiB) to take the real Pallas dispatch on every chip;
    #    rows is not a multiple of the block size, so the final row-block of
    #    the grid is ragged and masked by Pallas.
    x_big = jax.random.normal(k4, (9, 16, 128, 128), dtype=jnp.float32)
    y_big = jax.block_until_ready(inverted_relu(x_big))
    assert y_big.shape == x_big.shape and y_big.dtype == x_big.dtype
    assert jnp.array_equal(y_big, _ref(x_big))

    print("KERNEL_OK")
</pallas_src>

<mosaic_0001>
module attributes {stable_mosaic.version = 11 : i64} {
  func.func @_inverted_relu_kernel(%arg0: i32, %arg1: memref<1024x128xf32, #tpu.memory_space<vmem>>, %arg2: memref<1024x128xf32, #tpu.memory_space<vmem>>) attributes {dimension_semantics = [#tpu.dimension_semantics<parallel>], iteration_bounds = array<i64: 1>, scalar_prefetch = 0 : i64, scratch_operands = 0 : i64, tpu.core_type = #tpu.core_type<tc>, window_params = [{transform_indices = @transform_0, window_bounds = array<i64: 1024, 128>}, {transform_indices = @transform_1, window_bounds = array<i64: 1024, 128>}]} {
    %c0 = arith.constant 0 : index
    %c0_0 = arith.constant 0 : index
    %0 = vector.load %arg1[%c0, %c0_0] : memref<1024x128xf32, #tpu.memory_space<vmem>>, vector<1024x128xf32>
    %cst = arith.constant 0.000000e+00 : f32
    %1 = vector.broadcast %cst : f32 to vector<1024x128xf32>
    %2 = arith.maximumf %0, %1 : vector<1024x128xf32>
    %cst_1 = arith.constant 0.000000e+00 : f32
    %3 = vector.broadcast %cst_1 : f32 to vector<1024x128xf32>
    %4 = arith.subf %3, %2 : vector<1024x128xf32>
    %c0_2 = arith.constant 0 : index
    %c0_3 = arith.constant 0 : index
    %5 = vector.load %arg2[%c0_2, %c0_3] : memref<1024x128xf32, #tpu.memory_space<vmem>>, vector<1024x128xf32>
    tpu.vector_store %arg2[%c0_2, %c0_3], %4 {strides = array<i32>} : memref<1024x128xf32, #tpu.memory_space<vmem>>, vector<1024x128xf32>,
    return
  }
  func.func @transform_0(%arg0: i32) -> (i32, i32) {
    %c0_i32 = arith.constant 0 : i32
    %c0_i32_0 = arith.constant 0 : i32
    return %arg0, %c0_i32 : i32, i32
  }
  func.func @transform_1(%arg0: i32) -> (i32, i32) {
    %c0_i32 = arith.constant 0 : i32
    %c0_i32_0 = arith.constant 0 : i32
    return %arg0, %c0_i32 : i32, i32
  }
}

</mosaic_0001>

<llo_original>
// kernel: tpu_custom_call.1
$region0: #{tpu_custom_call.1}
  #allocation0 [shape = 'u32[]', space=smem, size = 0x4, offset = 0x4, fixed_abs, tag = 'smem constant byte address 0x4 - core index']
  #allocation1 [shape = 'u32[144,128]{1,0:T(1,128)}', space=vmem, size = 0x12000, scoped, tag = 'internal scratch']
  %s0 = inlined_call_operand.hbm [shape: f32[1024,128], index: 0, kind: input, shape index: {}]
  %s1 = inlined_call_operand.hbm [shape: f32[1024,128], index: 1, kind: output, shape index: {}]
  %s2 = sld [smem:[#allocation0]]
  $region18: #{tpu_custom_call.1} parent=0
    _
  %s4 = ssub.s32 1, %s2
  %s5 = scalar_select 0, %s4, %s2
  $region1: #{tpu_custom_call.1} parent=0
    #allocation2 [shape = 'u8[524288]{0}', space=vmem, size = 0x80000, scoped, tag = 'input window, operand 0, single buffered']
    #allocation3 [shape = 's32[1]{0}', space=sflag, size = 0x4, scoped, tag = 'scoped memory for tpu_custom_call.1']
    #allocation4 [shape = 's32[1]{0}', space=sflag, size = 0x4, scoped, tag = 'scoped memory for tpu_custom_call.1']
    #allocation5 [shape = 'u8[524288]{0}', space=vmem, size = 0x80000, scoped, tag = 'output window, operand 0, single buffered']
    %6 = vsyncpa [#allocation3], 0
    %7 = vsyncpa [#allocation4], 0
    // Predicated region
    $region2: #{tpu_custom_call.1} parent=1 // pred_check
      _
    $region3: #{tpu_custom_call.1} parent=1 // pred_check_branch
      %9 = sbr.rel (0) target = $region5
    $region4: #{tpu_custom_call.1} parent=1 // pred_region
      %s11 = ssub.s32 16384, 16384
      %12 = vsyncadd [#allocation3], %s11
      %s13 = sshll.u32 [#allocation2], 4
      %s14 = int_to_ptr.vmem [resolvable:$true] %s13
      %19 = dma.hbm_to_vmem [thread:$0]  %s0, 16384, %s14, [#allocation3], 128, 128, 8
    $region5: #{tpu_custom_call.1} parent=1 // pred_fallthru
      _
    // Predicated region
    $region6: #{tpu_custom_call.1} parent=1 // pred_check
      _
    $region7: #{tpu_custom_call.1} parent=1 // pred_check_branch
      %21 = sbr.rel (0) target = $region9
    $region8: #{tpu_custom_call.1} parent=1 // pred_region
      %22 = dma.done [#allocation3], 16384
    $region9: #{tpu_custom_call.1} parent=1 // pred_fallthru
      _
    %v23 = vld [vmem:[#allocation2] sm:$0xff]
    %v24 = vld [vmem:[#allocation2 + $0x8] sm:$0xff]
    %v25 = vld [vmem:[#allocation2 + $0x10] sm:$0xff]
    %v26 = vld [vmem:[#allocation2 + $0x18] sm:$0xff]
    %v27 = vld [vmem:[#allocation2 + $0x20] sm:$0xff]
    %v28 = vld [vmem:[#allocation2 + $0x28] sm:$0xff]
    %v29 = vld [vmem:[#allocation2 + $0x30] sm:$0xff]
    %v30 = vld [vmem:[#allocation2 + $0x38] sm:$0xff]
    %v31 = vld [vmem:[#allocation2 + $0x40] sm:$0xff]
    %v32 = vld [vmem:[#allocation2 + $0x48] sm:$0xff]
    %v33 = vld [vmem:[#allocation2 + $0x50] sm:$0xff]
    %v34 = vld [vmem:[#allocation2 + $0x58] sm:$0xff]
    %v35 = vld [vmem:[#allocation2 + $0x60] sm:$0xff]
    %v36 = vld [vmem:[#allocation2 + $0x68] sm:$0xff]
    %v37 = vld [vmem:[#allocation2 + $0x70] sm:$0xff]
    %v38 = vld [vmem:[#allocation2 + $0x78] sm:$0xff]
    %v39 = vld [vmem:[#allocation2 + $0x80] sm:$0xff]
    %v40 = vld [vmem:[#allocation2 + $0x88] sm:$0xff]
    %v41 = vld [vmem:[#allocation2 + $0x90] sm:$0xff]
    %v42 = vld [vmem:[#allocation2 + $0x98] sm:$0xff]
    %v43 = vld [vmem:[#allocation2 + $0xa0] sm:$0xff]
    %v44 = vld [vmem:[#allocation2 + $0xa8] sm:$0xff]
    %v45 = vld [vmem:[#allocation2 + $0xb0] sm:$0xff]
    %v46 = vld [vmem:[#allocation2 + $0xb8] sm:$0xff]
    %v47 = vld [vmem:[#allocation2 + $0xc0] sm:$0xff]
    %v48 = vld [vmem:[#allocation2 + $0xc8] sm:$0xff]
    %v49 = vld [vmem:[#allocation2 + $0xd0] sm:$0xff]
    %v50 = vld [vmem:[#allocation2 + $0xd8] sm:$0xff]
    %v51 = vld [vmem:[#allocation2 + $0xe0] sm:$0xff]
    %v52 = vld [vmem:[#allocation2 + $0xe8] sm:$0xff]
    %v53 = vld [vmem:[#allocation2 + $0xf0] sm:$0xff]
    %v54 = vld [vmem:[#allocation2 + $0xf8] sm:$0xff]
    %v55 = vld [vmem:[#allocation2 + $0x100] sm:$0xff]
    %v56 = vld [vmem:[#allocation2 + $0x108] sm:$0xff]
    %v57 = vld [vmem:[#allocation2 + $0x110] sm:$0xff]
    %v58 = vld [vmem:[#allocation2 + $0x118] sm:$0xff]
    %v59 = vld [vmem:[#allocation2 + $0x120] sm:$0xff]
    %v60 = vld [vmem:[#allocation2 + $0x128] sm:$0xff]
    %v61 = vld [vmem:[#allocation2 + $0x130] sm:$0xff]
    %v62 = vld [vmem:[#allocation2 + $0x138] sm:$0xff]
    %v63 = vld [vmem:[#allocation2 + $0x140] sm:$0xff]
    %v64 = vld [vmem:[#allocation2 + $0x148] sm:$0xff]
    %v65 = vld [vmem:[#allocation2 + $0x150] sm:$0xff]
    %v66 = vld [vmem:[#allocation2 + $0x158] sm:$0xff]
    %v67 = vld [vmem:[#allocation2 + $0x160] sm:$0xff]
    %v68 = vld [vmem:[#allocation2 + $0x168] sm:$0xff]
    %v69 = vld [vmem:[#allocation2 + $0x170] sm:$0xff]
    %v70 = vld [vmem:[#allocation2 + $0x178] sm:$0xff]
    %v71 = vld [vmem:[#allocation2 + $0x180] sm:$0xff]
    %v72 = vld [vmem:[#allocation2 + $0x188] sm:$0xff]
    %v73 = vld [vmem:[#allocation2 + $0x190] sm:$0xff]
    %v74 = vld [vmem:[#allocation2 + $0x198] sm:$0xff]
    %v75 = vld [vmem:[#allocation2 + $0x1a0] sm:$0xff]
    %v76 = vld [vmem:[#allocation2 + $0x1a8] sm:$0xff]
    %v77 = vld [vmem:[#allocation2 + $0x1b0] sm:$0xff]
    %v78 = vld [vmem:[#allocation2 + $0x1b8] sm:$0xff]
    %v79 = vld [vmem:[#allocation2 + $0x1c0] sm:$0xff]
    %v80 = vld [vmem:[#allocation2 + $0x1c8] sm:$0xff]
    %v81 = vld [vmem:[#allocation2 + $0x1d0] sm:$0xff]
    %v82 = vld [vmem:[#allocation2 + $0x1d8] sm:$0xff]
    %v83 = vld [vmem:[#allocation2 + $0x1e0] sm:$0xff]
    %v84 = vld [vmem:[#allocation2 + $0x1e8] sm:$0xff]
    %v85 = vld [vmem:[#allocation2 + $0x1f0] sm:$0xff]
    %v86 = vld [vmem:[#allocation2 + $0x1f8] sm:$0xff]
    %v87 = vld [vmem:[#allocation2 + $0x200] sm:$0xff]
    %v88 = vld [vmem:[#allocation2 + $0x208] sm:$0xff]
    %v89 = vld [vmem:[#allocation2 + $0x210] sm:$0xff]
    %v90 = vld [vmem:[#allocation2 + $0x218] sm:$0xff]
    %v91 = vld [vmem:[#allocation2 + $0x220] sm:$0xff]
    %v92 = vld [vmem:[#allocation2 + $0x228] sm:$0xff]
    %v93 = vld [vmem:[#allocation2 + $0x230] sm:$0xff]
    %v94 = vld [vmem:[#allocation2 + $0x238] sm:$0xff]
    %v95 = vld [vmem:[#allocation2 + $0x240] sm:$0xff]
    %v96 = vld [vmem:[#allocation2 + $0x248] sm:$0xff]
    %v97 = vld [vmem:[#allocation2 + $0x250] sm:$0xff]
    %v98 = vld [vmem:[#allocation2 + $0x258] sm:$0xff]
    %v99 = vld [vmem:[#allocation2 + $0x260] sm:$0xff]
    %v100 = vld [vmem:[#allocation2 + $0x268] sm:$0xff]
    %v101 = vld [vmem:[#allocation2 + $0x270] sm:$0xff]
    %v102 = vld [vmem:[#allocation2 + $0x278] sm:$0xff]
    %v103 = vld [vmem:[#allocation2 + $0x280] sm:$0xff]
    %v104 = vld [vmem:[#allocation2 + $0x288] sm:$0xff]
    %v105 = vld [vmem:[#allocation2 + $0x290] sm:$0xff]
    %v106 = vld [vmem:[#allocation2 + $0x298] sm:$0xff]
    %v107 = vld [vmem:[#allocation2 + $0x2a0] sm:$0xff]
    %v108 = vld [vmem:[#allocation2 + $0x2a8] sm:$0xff]
    %v109 = vld [vmem:[#allocation2 + $0x2b0] sm:$0xff]
    %v110 = vld [vmem:[#allocation2 + $0x2b8] sm:$0xff]
    %v111 = vld [vmem:[#allocation2 + $0x2c0] sm:$0xff]
    %v112 = vld [vmem:[#allocation2 + $0x2c8] sm:$0xff]
    %v113 = vld [vmem:[#allocation2 + $0x2d0] sm:$0xff]
    %v114 = vld [vmem:[#allocation2 + $0x2d8] sm:$0xff]
    %v115 = vld [vmem:[#allocation2 + $0x2e0] sm:$0xff]
    %v116 = vld [vmem:[#allocation2 + $0x2e8] sm:$0xff]
    %v117 = vld [vmem:[#allocation2 + $0x2f0] sm:$0xff]
    %v118 = vld [vmem:[#allocation2 + $0x2f8] sm:$0xff]
    %v119 = vld [vmem:[#allocation2 + $0x300] sm:$0xff]
    %v120 = vld [vmem:[#allocation2 + $0x308] sm:$0xff]
    %v121 = vld [vmem:[#allocation2 + $0x310] sm:$0xff]
    %v122 = vld [vmem:[#allocation2 + $0x318] sm:$0xff]
    %v123 = vld [vmem:[#allocation2 + $0x320] sm:$0xff]
    %v124 = vld [vmem:[#allocation2 + $0x328] sm:$0xff]
    %v125 = vld [vmem:[#allocation2 + $0x330] sm:$0xff]
    %v126 = vld [vmem:[#allocation2 + $0x338] sm:$0xff]
    %v127 = vld [vmem:[#allocation2 + $0x340] sm:$0xff]
    %v128 = vld [vmem:[#allocation2 + $0x348] sm:$0xff]
    %v129 = vld [vmem:[#allocation2 + $0x350] sm:$0xff]
    %v130 = vld [vmem:[#allocation2 + $0x358] sm:$0xff]
    %v131 = vld [vmem:[#allocation2 + $0x360] sm:$0xff]
    %v132 = vld [vmem:[#allocation2 + $0x368] sm:$0xff]
    %v133 = vld [vmem:[#allocation2 + $0x370] sm:$0xff]
    %v134 = vld [vmem:[#allocation2 + $0x378] sm:$0xff]
    %v135 = vld [vmem:[#allocation2 + $0x380] sm:$0xff]
    %v136 = vld [vmem:[#allocation2 + $0x388] sm:$0xff]
    %v137 = vld [vmem:[#allocation2 + $0x390] sm:$0xff]
    %v138 = vld [vmem:[#allocation2 + $0x398] sm:$0xff]
    %v139 = vld [vmem:[#allocation2 + $0x3a0] sm:$0xff]
    %v140 = vld [vmem:[#allocation2 + $0x3a8] sm:$0xff]
    %v141 = vld [vmem:[#allocation2 + $0x3b0] sm:$0xff]
    %v142 = vld [vmem:[#allocation2 + $0x3b8] sm:$0xff]
    %v143 = vld [vmem:[#allocation2 + $0x3c0] sm:$0xff]
    %v144 = vld [vmem:[#allocation2 + $0x3c8] sm:$0xff]
    %v145 = vld [vmem:[#allocation2 + $0x3d0] sm:$0xff]
    %v146 = vld [vmem:[#allocation2 + $0x3d8] sm:$0xff]
    %v147 = vld [vmem:[#allocation2 + $0x3e0] sm:$0xff]
    %v148 = vld [vmem:[#allocation2 + $0x3e8] sm:$0xff]
    %v149 = vld [vmem:[#allocation2 + $0x3f0] sm:$0xff]
    %v150 = vld [vmem:[#allocation2 + $0x3f8] sm:$0xff]
    %v151 = vmax.f32 %v23, 0.0
    %v152 = vmax.f32 %v24, 0.0
    %v153 = vmax.f32 %v25, 0.0
    %v154 = vmax.f32 %v26, 0.0
    %v155 = vmax.f32 %v27, 0.0
    %v156 = vmax.f32 %v28, 0.0
    %v157 = vmax.f32 %v29, 0.0
    %v158 = vmax.f32 %v30, 0.0
    %v159 = vmax.f32 %v31, 0.0
    %v160 = vmax.f32 %v32, 0.0
    %v161 = vmax.f32 %v33, 0.0
    %v162 = vmax.f32 %v34, 0.0
    %v163 = vmax.f32 %v35, 0.0
    %v164 = vmax.f32 %v36, 0.0
    %v165 = vmax.f32 %v37, 0.0
    %v166 = vmax.f32 %v38, 0.0
    %v167 = vmax.f32 %v39, 0.0
    %v168 = vmax.f32 %v40, 0.0
    %v169 = vmax.f32 %v41, 0.0
    %v170 = vmax.f32 %v42, 0.0
    %v171 = vmax.f32 %v43, 0.0
    %v172 = vmax.f32 %v44, 0.0
    %v173 = vmax.f32 %v45, 0.0
    %v174 = vmax.f32 %v46, 0.0
    %v175 = vmax.f32 %v47, 0.0
    %v176 = vmax.f32 %v48, 0.0
    %v177 = vmax.f32 %v49, 0.0
    %v178 = vmax.f32 %v50, 0.0
    %v179 = vmax.f32 %v51, 0.0
    %v180 = vmax.f32 %v52, 0.0
    %v181 = vmax.f32 %v53, 0.0
    %v182 = vmax.f32 %v54, 0.0
    %v183 = vmax.f32 %v55, 0.0
    %v184 = vmax.f32 %v56, 0.0
    %v185 = vmax.f32 %v57, 0.0
    %v186 = vmax.f32 %v58, 0.0
    %v187 = vmax.f32 %v59, 0.0
    %v188 = vmax.f32 %v60, 0.0
    %v189 = vmax.f32 %v61, 0.0
    %v190 = vmax.f32 %v62, 0.0
    %v191 = vmax.f32 %v63, 0.0
    %v192 = vmax.f32 %v64, 0.0
    %v193 = vmax.f32 %v65, 0.0
    %v194 = vmax.f32 %v66, 0.0
    %v195 = vmax.f32 %v67, 0.0
    %v196 = vmax.f32 %v68, 0.0
    %v197 = vmax.f32 %v69, 0.0
    %v198 = vmax.f32 %v70, 0.0
    %v199 = vmax.f32 %v71, 0.0
    %v200 = vmax.f32 %v72, 0.0
    %v201 = vmax.f32 %v73, 0.0
    %v202 = vmax.f32 %v74, 0.0
    %v203 = vmax.f32 %v75, 0.0
    %v204 = vmax.f32 %v76, 0.0
    %v205 = vmax.f32 %v77, 0.0
    %v206 = vmax.f32 %v78, 0.0
    %v207 = vmax.f32 %v79, 0.0
    %v208 = vmax.f32 %v80, 0.0
    %v209 = vmax.f32 %v81, 0.0
    %v210 = vmax.f32 %v82, 0.0
    %v211 = vmax.f32 %v83, 0.0
    %v212 = vmax.f32 %v84, 0.0
    %v213 = vmax.f32 %v85, 0.0
    %v214 = vmax.f32 %v86, 0.0
    %v215 = vmax.f32 %v87, 0.0
    %v216 = vmax.f32 %v88, 0.0
    %v217 = vmax.f32 %v89, 0.0
    %v218 = vmax.f32 %v90, 0.0
    %v219 = vmax.f32 %v91, 0.0
    %v220 = vmax.f32 %v92, 0.0
    %v221 = vmax.f32 %v93, 0.0
    %v222 = vmax.f32 %v94, 0.0
    %v223 = vmax.f32 %v95, 0.0
    %v224 = vmax.f32 %v96, 0.0
    %v225 = vmax.f32 %v97, 0.0
    %v226 = vmax.f32 %v98, 0.0
    %v227 = vmax.f32 %v99, 0.0
    %v228 = vmax.f32 %v100, 0.0
    %v229 = vmax.f32 %v101, 0.0
    %v230 = vmax.f32 %v102, 0.0
    %v231 = vmax.f32 %v103, 0.0
    %v232 = vmax.f32 %v104, 0.0
    %v233 = vmax.f32 %v105, 0.0
    %v234 = vmax.f32 %v106, 0.0
    %v235 = vmax.f32 %v107, 0.0
    %v236 = vmax.f32 %v108, 0.0
    %v237 = vmax.f32 %v109, 0.0
    %v238 = vmax.f32 %v110, 0.0
    %v239 = vmax.f32 %v111, 0.0
    %v240 = vmax.f32 %v112, 0.0
    %v241 = vmax.f32 %v113, 0.0
    %v242 = vmax.f32 %v114, 0.0
    %v243 = vmax.f32 %v115, 0.0
    %v244 = vmax.f32 %v116, 0.0
    %v245 = vmax.f32 %v117, 0.0
    %v246 = vmax.f32 %v118, 0.0
    %v247 = vmax.f32 %v119, 0.0
    %v248 = vmax.f32 %v120, 0.0
    %v249 = vmax.f32 %v121, 0.0
    %v250 = vmax.f32 %v122, 0.0
    %v251 = vmax.f32 %v123, 0.0
    %v252 = vmax.f32 %v124, 0.0
    %v253 = vmax.f32 %v125, 0.0
    %v254 = vmax.f32 %v126, 0.0
    %v255 = vmax.f32 %v127, 0.0
    %v256 = vmax.f32 %v128, 0.0
    %v257 = vmax.f32 %v129, 0.0
    %v258 = vmax.f32 %v130, 0.0
    %v259 = vmax.f32 %v131, 0.0
    %v260 = vmax.f32 %v132, 0.0
    %v261 = vmax.f32 %v133, 0.0
    %v262 = vmax.f32 %v134, 0.0
    %v263 = vmax.f32 %v135, 0.0
    %v264 = vmax.f32 %v136, 0.0
    %v265 = vmax.f32 %v137, 0.0
    %v266 = vmax.f32 %v138, 0.0
    %v267 = vmax.f32 %v139, 0.0
    %v268 = vmax.f32 %v140, 0.0
    %v269 = vmax.f32 %v141, 0.0
    %v270 = vmax.f32 %v142, 0.0
    %v271 = vmax.f32 %v143, 0.0
    %v272 = vmax.f32 %v144, 0.0
    %v273 = vmax.f32 %v145, 0.0
    %v274 = vmax.f32 %v146, 0.0
    %v275 = vmax.f32 %v147, 0.0
    %v276 = vmax.f32 %v148, 0.0
    %v277 = vmax.f32 %v149, 0.0
    %v278 = vmax.f32 %v150, 0.0
    %v279 = vsub.f32 0.0, %v151
    %v280 = vsub.f32 0.0, %v152
    %v281 = vsub.f32 0.0, %v153
    %v282 = vsub.f32 0.0, %v154
    %v283 = vsub.f32 0.0, %v155
    %v284 = vsub.f32 0.0, %v156
    %v285 = vsub.f32 0.0, %v157
    %v286 = vsub.f32 0.0, %v158
    %v287 = vsub.f32 0.0, %v159
    %v288 = vsub.f32 0.0, %v160
    %v289 = vsub.f32 0.0, %v161
    %v290 = vsub.f32 0.0, %v162
    %v291 = vsub.f32 0.0, %v163
    %v292 = vsub.f32 0.0, %v164
    %v293 = vsub.f32 0.0, %v165
    %v294 = vsub.f32 0.0, %v166
    %v295 = vsub.f32 0.0, %v167
    %v296 = vsub.f32 0.0, %v168
    %v297 = vsub.f32 0.0, %v169
    %v298 = vsub.f32 0.0, %v170
    %v299 = vsub.f32 0.0, %v171
    %v300 = vsub.f32 0.0, %v172
    %v301 = vsub.f32 0.0, %v173
    %v302 = vsub.f32 0.0, %v174
    %v303 = vsub.f32 0.0, %v175
    %v304 = vsub.f32 0.0, %v176
    %v305 = vsub.f32 0.0, %v177
    %v306 = vsub.f32 0.0, %v178
    %v307 = vsub.f32 0.0, %v179
    %v308 = vsub.f32 0.0, %v180
    %v309 = vsub.f32 0.0, %v181
    %v310 = vsub.f32 0.0, %v182
    %v311 = vsub.f32 0.0, %v183
    %v312 = vsub.f32 0.0, %v184
    %v313 = vsub.f32 0.0, %v185
    %v314 = vsub.f32 0.0, %v186
    %v315 = vsub.f32 0.0, %v187
    %v316 = vsub.f32 0.0, %v188
    %v317 = vsub.f32 0.0, %v189
    %v318 = vsub.f32 0.0, %v190
    %v319 = vsub.f32 0.0, %v191
    %v320 = vsub.f32 0.0, %v192
    %v321 = vsub.f32 0.0, %v193
    %v322 = vsub.f32 0.0, %v194
    %v323 = vsub.f32 0.0, %v195
    %v324 = vsub.f32 0.0, %v196
    %v325 = vsub.f32 0.0, %v197
    %v326 = vsub.f32 0.0, %v198
    %v327 = vsub.f32 0.0, %v199
    %v328 = vsub.f32 0.0, %v200
    %v329 = vsub.f32 0.0, %v201
    %v330 = vsub.f32 0.0, %v202
    %v331 = vsub.f32 0.0, %v203
    %v332 = vsub.f32 0.0, %v204
    %v333 = vsub.f32 0.0, %v205
    %v334 = vsub.f32 0.0, %v206
    %v335 = vsub.f32 0.0, %v207
    %v336 = vsub.f32 0.0, %v208
    %v337 = vsub.f32 0.0, %v209
    %v338 = vsub.f32 0.0, %v210
    %v339 = vsub.f32 0.0, %v211
    %v340 = vsub.f32 0.0, %v212
    %v341 = vsub.f32 0.0, %v213
    %v342 = vsub.f32 0.0, %v214
    %v343 = vsub.f32 0.0, %v215
    %v344 = vsub.f32 0.0, %v216
    %v345 = vsub.f32 0.0, %v217
    %v346 = vsub.f32 0.0, %v218
    %v347 = vsub.f32 0.0, %v219
    %v348 = vsub.f32 0.0, %v220
    %v349 = vsub.f32 0.0, %v221
    %v350 = vsub.f32 0.0, %v222
    %v351 = vsub.f32 0.0, %v223
    %v352 = vsub.f32 0.0, %v224
    %v353 = vsub.f32 0.0, %v225
    %v354 = vsub.f32 0.0, %v226
    %v355 = vsub.f32 0.0, %v227
    %v356 = vsub.f32 0.0, %v228
    %v357 = vsub.f32 0.0, %v229
    %v358 = vsub.f32 0.0, %v230
    %v359 = vsub.f32 0.0, %v231
    %v360 = vsub.f32 0.0, %v232
    %v361 = vsub.f32 0.0, %v233
    %v362 = vsub.f32 0.0, %v234
    %v363 = vsub.f32 0.0, %v235
    %v364 = vsub.f32 0.0, %v236
    %v365 = vsub.f32 0.0, %v237
    %v366 = vsub.f32 0.0, %v238
    %v367 = vsub.f32 0.0, %v239
    %v368 = vsub.f32 0.0, %v240
    %v369 = vsub.f32 0.0, %v241
    %v370 = vsub.f32 0.0, %v242
    %v371 = vsub.f32 0.0, %v243
    %v372 = vsub.f32 0.0, %v244
    %v373 = vsub.f32 0.0, %v245
    %v374 = vsub.f32 0.0, %v246
    %v375 = vsub.f32 0.0, %v247
    %v376 = vsub.f32 0.0, %v248
    %v377 = vsub.f32 0.0, %v249
    %v378 = vsub.f32 0.0, %v250
    %v379 = vsub.f32 0.0, %v251
    %v380 = vsub.f32 0.0, %v252
    %v381 = vsub.f32 0.0, %v253
    %v382 = vsub.f32 0.0, %v254
    %v383 = vsub.f32 0.0, %v255
    %v384 = vsub.f32 0.0, %v256
    %v385 = vsub.f32 0.0, %v257
    %v386 = vsub.f32 0.0, %v258
    %v387 = vsub.f32 0.0, %v259
    %v388 = vsub.f32 0.0, %v260
    %v389 = vsub.f32 0.0, %v261
    %v390 = vsub.f32 0.0, %v262
    %v391 = vsub.f32 0.0, %v263
    %v392 = vsub.f32 0.0, %v264
    %v393 = vsub.f32 0.0, %v265
    %v394 = vsub.f32 0.0, %v266
    %v395 = vsub.f32 0.0, %v267
    %v396 = vsub.f32 0.0, %v268
    %v397 = vsub.f32 0.0, %v269
    %v398 = vsub.f32 0.0, %v270
    %v399 = vsub.f32 0.0, %v271
    %v400 = vsub.f32 0.0, %v272
    %v401 = vsub.f32 0.0, %v273
    %v402 = vsub.f32 0.0, %v274
    %v403 = vsub.f32 0.0, %v275
    %v404 = vsub.f32 0.0, %v276
    %v405 = vsub.f32 0.0, %v277
    %v406 = vsub.f32 0.0, %v278
    %407 = vst [vmem:[#allocation5] sm:$0xff] %v279
    %408 = vst [vmem:[#allocation5 + $0x8] sm:$0xff] %v280
    %409 = vst [vmem:[#allocation5 + $0x10] sm:$0xff] %v281
    %410 = vst [vmem:[#allocation5 + $0x18] sm:$0xff] %v282
    %411 = vst [vmem:[#allocation5 + $0x20] sm:$0xff] %v283
    %412 = vst [vmem:[#allocation5 + $0x28] sm:$0xff] %v284
    %413 = vst [vmem:[#allocation5 + $0x30] sm:$0xff] %v285
    %414 = vst [vmem:[#allocation5 + $0x38] sm:$0xff] %v286
    %415 = vst [vmem:[#allocation5 + $0x40] sm:$0xff] %v287
    %416 = vst [vmem:[#allocation5 + $0x48] sm:$0xff] %v288
    %417 = vst [vmem:[#allocation5 + $0x50] sm:$0xff] %v289
    %418 = vst [vmem:[#allocation5 + $0x58] sm:$0xff] %v290
    %419 = vst [vmem:[#allocation5 + $0x60] sm:$0xff] %v291
    %420 = vst [vmem:[#allocation5 + $0x68] sm:$0xff] %v292
    %421 = vst [vmem:[#allocation5 + $0x70] sm:$0xff] %v293
    %422 = vst [vmem:[#allocation5 + $0x78] sm:$0xff] %v294
    %423 = vst [vmem:[#allocation5 + $0x80] sm:$0xff] %v295
    %424 = vst [vmem:[#allocation5 + $0x88] sm:$0xff] %v296
    %425 = vst [vmem:[#allocation5 + $0x90] sm:$0xff] %v297
    %426 = vst [vmem:[#allocation5 + $0x98] sm:$0xff] %v298
    %427 = vst [vmem:[#allocation5 + $0xa0] sm:$0xff] %v299
    %428 = vst [vmem:[#allocation5 + $0xa8] sm:$0xff] %v300
    %429 = vst [vmem:[#allocation5 + $0xb0] sm:$0xff] %v301
    %430 = vst [vmem:[#allocation5 + $0xb8] sm:$0xff] %v302
    %431 = vst [vmem:[#allocation5 + $0xc0] sm:$0xff] %v303
    %432 = vst [vmem:[#allocation5 + $0xc8] sm:$0xff] %v304
    %433 = vst [vmem:[#allocation5 + $0xd0] sm:$0xff] %v305
    %434 = vst [vmem:[#allocation5 + $0xd8] sm:$0xff] %v306
    %435 = vst [vmem:[#allocation5 + $0xe0] sm:$0xff] %v307
    %436 = vst [vmem:[#allocation5 + $0xe8] sm:$0xff] %v308
    %437 = vst [vmem:[#allocation5 + $0xf0] sm:$0xff] %v309
    %438 = vst [vmem:[#allocation5 + $0xf8] sm:$0xff] %v310
    %439 = vst [vmem:[#allocation5 + $0x100] sm:$0xff] %v311
    %440 = vst [vmem:[#allocation5 + $0x108] sm:$0xff] %v312
    %441 = vst [vmem:[#allocation5 + $0x110] sm:$0xff] %v313
    %442 = vst [vmem:[#allocation5 + $0x118] sm:$0xff] %v314
    %443 = vst [vmem:[#allocation5 + $0x120] sm:$0xff] %v315
    %444 = vst [vmem:[#allocation5 + $0x128] sm:$0xff] %v316
    %445 = vst [vmem:[#allocation5 + $0x130] sm:$0xff] %v317
    %446 = vst [vmem:[#allocation5 + $0x138] sm:$0xff] %v318
    %447 = vst [vmem:[#allocation5 + $0x140] sm:$0xff] %v319
    %448 = vst [vmem:[#allocation5 + $0x148] sm:$0xff] %v320
    %449 = vst [vmem:[#allocation5 + $0x150] sm:$0xff] %v321
    %450 = vst [vmem:[#allocation5 + $0x158] sm:$0xff] %v322
    %451 = vst [vmem:[#allocation5 + $0x160] sm:$0xff] %v323
    %452 = vst [vmem:[#allocation5 + $0x168] sm:$0xff] %v324
    %453 = vst [vmem:[#allocation5 + $0x170] sm:$0xff] %v325
    %454 = vst [vmem:[#allocation5 + $0x178] sm:$0xff] %v326
    %455 = vst [vmem:[#allocation5 + $0x180] sm:$0xff] %v327
    %456 = vst [vmem:[#allocation5 + $0x188] sm:$0xff] %v328
    %457 = vst [vmem:[#allocation5 + $0x190] sm:$0xff] %v329
    %458 = vst [vmem:[#allocation5 + $0x198] sm:$0xff] %v330
    %459 = vst [vmem:[#allocation5 + $0x1a0] sm:$0xff] %v331
    %460 = vst [vmem:[#allocation5 + $0x1a8] sm:$0xff] %v332
    %461 = vst [vmem:[#allocation5 + $0x1b0] sm:$0xff] %v333
    %462 = vst [vmem:[#allocation5 + $0x1b8] sm:$0xff] %v334
    %463 = vst [vmem:[#allocation5 + $0x1c0] sm:$0xff] %v335
    %464 = vst [vmem:[#allocation5 + $0x1c8] sm:$0xff] %v336
    %465 = vst [vmem:[#allocation5 + $0x1d0] sm:$0xff] %v337
    %466 = vst [vmem:[#allocation5 + $0x1d8] sm:$0xff] %v338
    %467 = vst [vmem:[#allocation5 + $0x1e0] sm:$0xff] %v339
    %468 = vst [vmem:[#allocation5 + $0x1e8] sm:$0xff] %v340
    %469 = vst [vmem:[#allocation5 + $0x1f0] sm:$0xff] %v341
    %470 = vst [vmem:[#allocation5 + $0x1f8] sm:$0xff] %v342
    %471 = vst [vmem:[#allocation5 + $0x200] sm:$0xff] %v343
    %472 = vst [vmem:[#allocation5 + $0x208] sm:$0xff] %v344
    %473 = vst [vmem:[#allocation5 + $0x210] sm:$0xff] %v345
    %474 = vst [vmem:[#allocation5 + $0x218] sm:$0xff] %v346
    %475 = vst [vmem:[#allocation5 + $0x220] sm:$0xff] %v347
    %476 = vst [vmem:[#allocation5 + $0x228] sm:$0xff] %v348
    %477 = vst [vmem:[#allocation5 + $0x230] sm:$0xff] %v349
    %478 = vst [vmem:[#allocation5 + $0x238] sm:$0xff] %v350
    %479 = vst [vmem:[#allocation5 + $0x240] sm:$0xff] %v351
    %480 = vst [vmem:[#allocation5 + $0x248] sm:$0xff] %v352
    %481 = vst [vmem:[#allocation5 + $0x250] sm:$0xff] %v353
    %482 = vst [vmem:[#allocation5 + $0x258] sm:$0xff] %v354
    %483 = vst [vmem:[#allocation5 + $0x260] sm:$0xff] %v355
    %484 = vst [vmem:[#allocation5 + $0x268] sm:$0xff] %v356
    %485 = vst [vmem:[#allocation5 + $0x270] sm:$0xff] %v357
    %486 = vst [vmem:[#allocation5 + $0x278] sm:$0xff] %v358
    %487 = vst [vmem:[#allocation5 + $0x280] sm:$0xff] %v359
    %488 = vst [vmem:[#allocation5 + $0x288] sm:$0xff] %v360
    %489 = vst [vmem:[#allocation5 + $0x290] sm:$0xff] %v361
    %490 = vst [vmem:[#allocation5 + $0x298] sm:$0xff] %v362
    %491 = vst [vmem:[#allocation5 + $0x2a0] sm:$0xff] %v363
    %492 = vst [vmem:[#allocation5 + $0x2a8] sm:$0xff] %v364
    %493 = vst [vmem:[#allocation5 + $0x2b0] sm:$0xff] %v365
    %494 = vst [vmem:[#allocation5 + $0x2b8] sm:$0xff] %v366
    %495 = vst [vmem:[#allocation5 + $0x2c0] sm:$0xff] %v367
    %496 = vst [vmem:[#allocation5 + $0x2c8] sm:$0xff] %v368
    %497 = vst [vmem:[#allocation5 + $0x2d0] sm:$0xff] %v369
    %498 = vst [vmem:[#allocation5 + $0x2d8] sm:$0xff] %v370
    %499 = vst [vmem:[#allocation5 + $0x2e0] sm:$0xff] %v371
    %500 = vst [vmem:[#allocation5 + $0x2e8] sm:$0xff] %v372
    %501 = vst [vmem:[#allocation5 + $0x2f0] sm:$0xff] %v373
    %502 = vst [vmem:[#allocation5 + $0x2f8] sm:$0xff] %v374
    %503 = vst [vmem:[#allocation5 + $0x300] sm:$0xff] %v375
    %504 = vst [vmem:[#allocation5 + $0x308] sm:$0xff] %v376
    %505 = vst [vmem:[#allocation5 + $0x310] sm:$0xff] %v377
    %506 = vst [vmem:[#allocation5 + $0x318] sm:$0xff] %v378
    %507 = vst [vmem:[#allocation5 + $0x320] sm:$0xff] %v379
    %508 = vst [vmem:[#allocation5 + $0x328] sm:$0xff] %v380
    %509 = vst [vmem:[#allocation5 + $0x330] sm:$0xff] %v381
    %510 = vst [vmem:[#allocation5 + $0x338] sm:$0xff] %v382
    %511 = vst [vmem:[#allocation5 + $0x340] sm:$0xff] %v383
    %512 = vst [vmem:[#allocation5 + $0x348] sm:$0xff] %v384
    %513 = vst [vmem:[#allocation5 + $0x350] sm:$0xff] %v385
    %514 = vst [vmem:[#allocation5 + $0x358] sm:$0xff] %v386
    %515 = vst [vmem:[#allocation5 + $0x360] sm:$0xff] %v387
    %516 = vst [vmem:[#allocation5 + $0x368] sm:$0xff] %v388
    %517 = vst [vmem:[#allocation5 + $0x370] sm:$0xff] %v389
    %518 = vst [vmem:[#allocation5 + $0x378] sm:$0xff] %v390
    %519 = vst [vmem:[#allocation5 + $0x380] sm:$0xff] %v391
    %520 = vst [vmem:[#allocation5 + $0x388] sm:$0xff] %v392
    %521 = vst [vmem:[#allocation5 + $0x390] sm:$0xff] %v393
    %522 = vst [vmem:[#allocation5 + $0x398] sm:$0xff] %v394
    %523 = vst [vmem:[#allocation5 + $0x3a0] sm:$0xff] %v395
    %524 = vst [vmem:[#allocation5 + $0x3a8] sm:$0xff] %v396
    %525 = vst [vmem:[#allocation5 + $0x3b0] sm:$0xff] %v397
    %526 = vst [vmem:[#allocation5 + $0x3b8] sm:$0xff] %v398
    %527 = vst [vmem:[#allocation5 + $0x3c0] sm:$0xff] %v399
    %528 = vst [vmem:[#allocation5 + $0x3c8] sm:$0xff] %v400
    %529 = vst [vmem:[#allocation5 + $0x3d0] sm:$0xff] %v401
    %530 = vst [vmem:[#allocation5 + $0x3d8] sm:$0xff] %v402
    %531 = vst [vmem:[#allocation5 + $0x3e0] sm:$0xff] %v403
    %532 = vst [vmem:[#allocation5 + $0x3e8] sm:$0xff] %v404
    %533 = vst [vmem:[#allocation5 + $0x3f0] sm:$0xff] %v405
    %534 = vst [vmem:[#allocation5 + $0x3f8] sm:$0xff] %v406
    // Predicated region
    $region10: #{tpu_custom_call.1} parent=1 // pred_check
      _
    $region11: #{tpu_custom_call.1} parent=1 // pred_check_branch
      %536 = sbr.rel (0) target = $region13
    $region12: #{tpu_custom_call.1} parent=1 // pred_region
      %s538 = ssub.s32 16384, 16384
      %539 = vsyncadd [#allocation4], %s538
      %s540 = sshll.u32 [#allocation5], 4
      %s541 = int_to_ptr.vmem [resolvable:$true] %s540
      %546 = dma.vmem_to_hbm [thread:$0]  %s541, 16384, %s1, [#allocation4], 128, 128, 8
    $region13: #{tpu_custom_call.1} parent=1 // pred_fallthru
      _
    // Predicated region
    $region14: #{tpu_custom_call.1} parent=1 // pred_check
      _
    $region15: #{tpu_custom_call.1} parent=1 // pred_check_branch
      %548 = sbr.rel (0) target = $region17
    $region16: #{tpu_custom_call.1} parent=1 // pred_region
      %549 = dma.done [#allocation4], 16384
    $region17: #{tpu_custom_call.1} parent=1 // pred_fallthru
      _
    %550 = vsyncpa [#allocation3], 1
    %551 = vsyncpa [#allocation4], 1

</llo_original>
